<compile_context>
chip_gen: v6e
topology: v6e:2x2x1
jax: 0.10.0
libtpu: 0.0.40
codegen_flags: <defaults>
</compile_context>

<pallas_src>
import jax
import jax.numpy as jnp
from jax.experimental import pallas as pl
from jax.experimental.pallas import tpu as pltpu

LANE = 128  # TPU lane width


def _round_up(n, m):
    return ((n + m - 1) // m) * m


def _pick_batch_tile(B):
    """Batch tile: one block for small B; 256-1024 rows (and >=2 grid steps,
    so v7x can use both TensorCores) for large rollout batches."""
    if B <= 256:
        return _round_up(B, 8)
    half = _round_up((B + 1) // 2, 8)
    return max(256, min(1024, half))


# --------------------------------------------------------------------------
# Kernel: fc1 -> tanh -> fc2 -> tanh -> fc3  (one batch tile per grid step)
# --------------------------------------------------------------------------
def policy_kernel(x_ref, w1_ref, b1_ref, w2_ref, b2_ref, w3_ref, b3_ref,
                  mean_ref):
    # bf16 MXU operands, f32 accumulation; tanh in f32.
    x = x_ref[...].astype(jnp.bfloat16)
    h1 = jnp.tanh(
        jnp.dot(x, w1_ref[...], preferred_element_type=jnp.float32)
        + b1_ref[...]
    )
    h2 = jnp.tanh(
        jnp.dot(h1.astype(jnp.bfloat16), w2_ref[...],
                preferred_element_type=jnp.float32)
        + b2_ref[...]
    )
    mean = (
        jnp.dot(h2.astype(jnp.bfloat16), w3_ref[...],
                preferred_element_type=jnp.float32)
        + b3_ref[...]
    )
    # Store only the real action columns (A << 128): 32x less HBM writeback
    # than the padded 128-lane block, and no wrapper-side reslice.
    mean_ref[...] = mean[:, : mean_ref.shape[1]]


# --------------------------------------------------------------------------
# Parameter prep (done once per parameter update, NOT per forward call):
#   pad hidden/action dims to 128 lanes, cast weights to bf16,
#   precompute softplus(sigma).
# --------------------------------------------------------------------------
def prepare_params(params):
    w1, b1, w2, b2, w3, b3, sigma = params
    S, H = w1.shape
    A = w3.shape[1]
    Hp = _round_up(H, LANE)   # keep at 128 — do NOT pad to 256 for v6e/v7x
    Ap = _round_up(A, LANE)

    def pad2(m, shape):
        out = jnp.zeros(shape, jnp.float32)
        return out.at[: m.shape[0], : m.shape[1]].set(m)

    return {
        "S": S, "H": H, "A": A, "Hp": Hp, "Ap": Ap,
        "w1": pad2(w1, (S, Hp)).astype(jnp.bfloat16),
        "b1": pad2(b1, (1, Hp)),
        "w2": pad2(w2, (Hp, Hp)).astype(jnp.bfloat16),
        "b2": pad2(b2, (1, Hp)),
        "w3": pad2(w3, (Hp, Ap)).astype(jnp.bfloat16),
        "b3": pad2(b3, (1, Ap)),
        # softplus(sigma) is x-independent: compute once here (stable form).
        "sigma": jax.nn.softplus(sigma),
    }


# --------------------------------------------------------------------------
# Forward wrapper
# --------------------------------------------------------------------------
def policy_forward(x, prepped):
    """Returns (action_mean, sigma) — the parameters of Normal(mean, sigma)."""
    B, S = x.shape
    Hp, Ap, A = prepped["Hp"], prepped["Ap"], prepped["A"]

    tm = _pick_batch_tile(B)
    grid = (pl.cdiv(B, tm),)

    mean = pl.pallas_call(
        policy_kernel,
        out_shape=jax.ShapeDtypeStruct((B, A), jnp.float32),
        grid=grid,
        in_specs=[
            pl.BlockSpec((tm, S), lambda i: (i, 0)),    # activation tile streams
            pl.BlockSpec((S, Hp), lambda i: (0, 0)),    # weights/biases: resident
            pl.BlockSpec((1, Hp), lambda i: (0, 0)),
            pl.BlockSpec((Hp, Hp), lambda i: (0, 0)),
            pl.BlockSpec((1, Hp), lambda i: (0, 0)),
            pl.BlockSpec((Hp, Ap), lambda i: (0, 0)),
            pl.BlockSpec((1, Ap), lambda i: (0, 0)),
        ],
        out_specs=pl.BlockSpec((tm, A), lambda i: (i, 0)),
        compiler_params=pltpu.CompilerParams(
            dimension_semantics=("parallel",)),
    )(x, prepped["w1"], prepped["b1"], prepped["w2"], prepped["b2"],
      prepped["w3"], prepped["b3"])

    return mean, prepped["sigma"]


# --------------------------------------------------------------------------
# Init (matches PolicyNN.init_weights: W ~ N(0,1), b = 0, sigma = 0.5)
# --------------------------------------------------------------------------
def init_params(key, state_space, action_space, hidden=64):
    k1, k2, k3 = jax.random.split(key, 3)
    w1 = jax.random.normal(k1, (state_space, hidden), jnp.float32)
    b1 = jnp.zeros((1, hidden), jnp.float32)
    w2 = jax.random.normal(k2, (hidden, hidden), jnp.float32)
    b2 = jnp.zeros((1, hidden), jnp.float32)
    w3 = jax.random.normal(k3, (hidden, action_space), jnp.float32)
    b3 = jnp.zeros((1, action_space), jnp.float32)
    sigma = jnp.full((1, action_space), 0.5, jnp.float32)
    return (w1, b1, w2, b2, w3, b3, sigma)


def reference_forward(x, prepped):
    # Mirrors the kernel's bf16-operand / f32-accumulate arithmetic.
    # NOTE: weights are quantized to bf16 in prepare_params, so there is a
    # small (<1e-2 typical) drift vs the exact f32 PyTorch PolicyNN.
    xb = x.astype(jnp.bfloat16)
    h1 = jnp.tanh(jnp.dot(xb, prepped["w1"],
                          preferred_element_type=jnp.float32) + prepped["b1"])
    h2 = jnp.tanh(jnp.dot(h1.astype(jnp.bfloat16), prepped["w2"],
                          preferred_element_type=jnp.float32) + prepped["b2"])
    mean = jnp.dot(h2.astype(jnp.bfloat16), prepped["w3"],
                   preferred_element_type=jnp.float32) + prepped["b3"]
    return mean[:, :prepped["A"]], prepped["sigma"]


if __name__ == "__main__":
    B, S, A, H = 8, 16, 4, 64  # batch, state_space, action_space, hidden

    key = jax.random.PRNGKey(0)
    kx, kp = jax.random.split(key)
    x = jax.random.normal(kx, (B, S), jnp.float32)
    params = init_params(kp, S, A, H)
    prepped = prepare_params(params)

    mean, sigma = policy_forward(x, prepped)
    mean = jax.block_until_ready(mean)
    sigma = jax.block_until_ready(sigma)

    ref_mean, ref_sigma = reference_forward(x, prepped)
    assert mean.shape == (B, A)
    assert jnp.allclose(mean, ref_mean, atol=1e-2, rtol=1e-2)
    assert jnp.allclose(sigma, jax.nn.softplus(params[6]), atol=1e-6)

    # TODO(synk): Normal(mean, sigma) distribution object / sampling is left to
    # the caller; the kernel returns the distribution parameters.
    print("KERNEL_OK")
</pallas_src>

<mosaic_0001>
module attributes {stable_mosaic.version = 11 : i64} {
  func.func @policy_kernel(%arg0: i32, %arg1: memref<8x16xf32, #tpu.memory_space<vmem>>, %arg2: memref<16x128xbf16, #tpu.memory_space<vmem>>, %arg3: memref<1x128xf32, #tpu.memory_space<vmem>>, %arg4: memref<128x128xbf16, #tpu.memory_space<vmem>>, %arg5: memref<1x128xf32, #tpu.memory_space<vmem>>, %arg6: memref<128x128xbf16, #tpu.memory_space<vmem>>, %arg7: memref<1x128xf32, #tpu.memory_space<vmem>>, %arg8: memref<8x4xf32, #tpu.memory_space<vmem>>) attributes {dimension_semantics = [#tpu.dimension_semantics<parallel>], iteration_bounds = array<i64: 1>, scalar_prefetch = 0 : i64, scratch_operands = 0 : i64, tpu.core_type = #tpu.core_type<tc>, window_params = [{transform_indices = @transform_0, window_bounds = array<i64: 8, 16>}, {pipeline_mode = #tpu.pipeline_mode<synchronous>, transform_indices = @transform_1, window_bounds = array<i64: 16, 128>}, {pipeline_mode = #tpu.pipeline_mode<synchronous>, transform_indices = @transform_2, window_bounds = array<i64: 1, 128>}, {pipeline_mode = #tpu.pipeline_mode<synchronous>, transform_indices = @transform_3, window_bounds = array<i64: 128, 128>}, {pipeline_mode = #tpu.pipeline_mode<synchronous>, transform_indices = @transform_4, window_bounds = array<i64: 1, 128>}, {pipeline_mode = #tpu.pipeline_mode<synchronous>, transform_indices = @transform_5, window_bounds = array<i64: 128, 128>}, {pipeline_mode = #tpu.pipeline_mode<synchronous>, transform_indices = @transform_6, window_bounds = array<i64: 1, 128>}, {transform_indices = @transform_7, window_bounds = array<i64: 8, 4>}]} {
    %c0 = arith.constant 0 : index
    %c0_0 = arith.constant 0 : index
    %0 = vector.load %arg1[%c0, %c0_0] : memref<8x16xf32, #tpu.memory_space<vmem>>, vector<8x16xf32>
    %1 = arith.truncf %0 : vector<8x16xf32> to vector<8x16xbf16>
    %c0_1 = arith.constant 0 : index
    %c0_2 = arith.constant 0 : index
    %2 = vector.load %arg2[%c0_1, %c0_2] : memref<16x128xbf16, #tpu.memory_space<vmem>>, vector<16x128xbf16>
    %cst = arith.constant dense<0.000000e+00> : vector<8x128xf32>
    %3 = tpu.matmul %1, %2, %cst {dimension_numbers = #tpu.dot_dimension_numbers<[1], [0], [0], [1], [0, 0, 1, 1], [], []>} : vector<8x16xbf16>, vector<16x128xbf16>, vector<8x128xf32> -> vector<8x128xf32>
    %c0_3 = arith.constant 0 : index
    %c0_4 = arith.constant 0 : index
    %4 = vector.load %arg3[%c0_3, %c0_4] : memref<1x128xf32, #tpu.memory_space<vmem>>, vector<1x128xf32>
    %5 = vector.broadcast %4 : vector<1x128xf32> to vector<8x128xf32>
    %6 = arith.addf %3, %5 : vector<8x128xf32>
    %7 = math.tanh %6 : vector<8x128xf32>
    %8 = arith.truncf %7 : vector<8x128xf32> to vector<8x128xbf16>
    %c0_5 = arith.constant 0 : index
    %c0_6 = arith.constant 0 : index
    %9 = vector.load %arg4[%c0_5, %c0_6] : memref<128x128xbf16, #tpu.memory_space<vmem>>, vector<128x128xbf16>
    %cst_7 = arith.constant dense<0.000000e+00> : vector<8x128xf32>
    %10 = tpu.matmul %8, %9, %cst_7 {dimension_numbers = #tpu.dot_dimension_numbers<[1], [0], [0], [1], [0, 0, 1, 1], [], []>} : vector<8x128xbf16>, vector<128x128xbf16>, vector<8x128xf32> -> vector<8x128xf32>
    %c0_8 = arith.constant 0 : index
    %c0_9 = arith.constant 0 : index
    %11 = vector.load %arg5[%c0_8, %c0_9] : memref<1x128xf32, #tpu.memory_space<vmem>>, vector<1x128xf32>
    %12 = vector.broadcast %11 : vector<1x128xf32> to vector<8x128xf32>
    %13 = arith.addf %10, %12 : vector<8x128xf32>
    %14 = math.tanh %13 : vector<8x128xf32>
    %15 = arith.truncf %14 : vector<8x128xf32> to vector<8x128xbf16>
    %c0_10 = arith.constant 0 : index
    %c0_11 = arith.constant 0 : index
    %16 = vector.load %arg6[%c0_10, %c0_11] : memref<128x128xbf16, #tpu.memory_space<vmem>>, vector<128x128xbf16>
    %cst_12 = arith.constant dense<0.000000e+00> : vector<8x128xf32>
    %17 = tpu.matmul %15, %16, %cst_12 {dimension_numbers = #tpu.dot_dimension_numbers<[1], [0], [0], [1], [0, 0, 1, 1], [], []>} : vector<8x128xbf16>, vector<128x128xbf16>, vector<8x128xf32> -> vector<8x128xf32>
    %c0_13 = arith.constant 0 : index
    %c0_14 = arith.constant 0 : index
    %18 = vector.load %arg7[%c0_13, %c0_14] : memref<1x128xf32, #tpu.memory_space<vmem>>, vector<1x128xf32>
    %19 = vector.broadcast %18 : vector<1x128xf32> to vector<8x128xf32>
    %20 = arith.addf %17, %19 : vector<8x128xf32>
    %21 = vector.extract_strided_slice %20 {offsets = [0, 0], sizes = [8, 4], strides = [1, 1]} : vector<8x128xf32> to vector<8x4xf32>
    %c0_15 = arith.constant 0 : index
    %c0_16 = arith.constant 0 : index
    %22 = vector.load %arg8[%c0_15, %c0_16] : memref<8x4xf32, #tpu.memory_space<vmem>>, vector<8x4xf32>
    tpu.vector_store %arg8[%c0_15, %c0_16], %21 {strides = array<i32>} : memref<8x4xf32, #tpu.memory_space<vmem>>, vector<8x4xf32>,
    return
  }
  func.func @transform_0(%arg0: i32) -> (i32, i32) {
    %c0_i32 = arith.constant 0 : i32
    %c0_i32_0 = arith.constant 0 : i32
    return %arg0, %c0_i32 : i32, i32
  }
  func.func @transform_1(%arg0: i32) -> (i32, i32) {
    %c0_i32 = arith.constant 0 : i32
    %c0_i32_0 = arith.constant 0 : i32
    %c0_i32_1 = arith.constant 0 : i32
    return %c0_i32, %c0_i32_0 : i32, i32
  }
  func.func @transform_2(%arg0: i32) -> (i32, i32) {
    %c0_i32 = arith.constant 0 : i32
    %c0_i32_0 = arith.constant 0 : i32
    %c0_i32_1 = arith.constant 0 : i32
    return %c0_i32, %c0_i32_0 : i32, i32
  }
  func.func @transform_3(%arg0: i32) -> (i32, i32) {
    %c0_i32 = arith.constant 0 : i32
    %c0_i32_0 = arith.constant 0 : i32
    %c0_i32_1 = arith.constant 0 : i32
    return %c0_i32, %c0_i32_0 : i32, i32
  }
  func.func @transform_4(%arg0: i32) -> (i32, i32) {
    %c0_i32 = arith.constant 0 : i32
    %c0_i32_0 = arith.constant 0 : i32
    %c0_i32_1 = arith.constant 0 : i32
    return %c0_i32, %c0_i32_0 : i32, i32
  }
  func.func @transform_5(%arg0: i32) -> (i32, i32) {
    %c0_i32 = arith.constant 0 : i32
    %c0_i32_0 = arith.constant 0 : i32
    %c0_i32_1 = arith.constant 0 : i32
    return %c0_i32, %c0_i32_0 : i32, i32
  }
  func.func @transform_6(%arg0: i32) -> (i32, i32) {
    %c0_i32 = arith.constant 0 : i32
    %c0_i32_0 = arith.constant 0 : i32
    %c0_i32_1 = arith.constant 0 : i32
    return %c0_i32, %c0_i32_0 : i32, i32
  }
  func.func @transform_7(%arg0: i32) -> (i32, i32) {
    %c0_i32 = arith.constant 0 : i32
    %c0_i32_0 = arith.constant 0 : i32
    return %arg0, %c0_i32 : i32, i32
  }
}

</mosaic_0001>

<llo_original>
// kernel: tpu_custom_call.1
$region0: #{tpu_custom_call.1}
  #allocation0 [shape = 'u32[]', space=smem, size = 0x4, offset = 0x4, fixed_abs, tag = 'smem constant byte address 0x4 - core index']
  #allocation1 [shape = 'u32[144,128]{1,0:T(1,128)}', space=vmem, size = 0x12000, scoped, tag = 'internal scratch']
  %s0 = inlined_call_operand.hbm [shape: f32[8,16], index: 0, kind: input, shape index: {}]
  %s1 = inlined_call_operand.hbm [shape: bf16[16,128], index: 1, kind: input, shape index: {}]
  %s2 = inlined_call_operand.vmem [shape: f32[1,128], index: 2, kind: input, shape index: {}]
  %s3 = inlined_call_operand.hbm [shape: bf16[128,128], index: 3, kind: input, shape index: {}]
  %s4 = inlined_call_operand.vmem [shape: f32[1,128], index: 4, kind: input, shape index: {}]
  %s5 = inlined_call_operand.hbm [shape: bf16[128,128], index: 5, kind: input, shape index: {}]
  %s6 = inlined_call_operand.vmem [shape: f32[1,128], index: 6, kind: input, shape index: {}]
  %s7 = inlined_call_operand.vmem [shape: f32[8,4], index: 7, kind: output, shape index: {}]
  %s8 = sld [smem:[#allocation0]]
  $region54: #{tpu_custom_call.1} parent=0
    _
  %s10 = ssub.s32 1, %s8
  %s11 = scalar_select 0, %s10, %s8
  $region1: #{tpu_custom_call.1} parent=0
    #allocation2 [shape = 'u8[4096]{0}', space=vmem, size = 0x1000, scoped, tag = 'input window, operand 0, single buffered']
    #allocation3 [shape = 's32[1]{0}', space=sflag, size = 0x4, scoped, tag = 'scoped memory for tpu_custom_call.1']
    #allocation4 [shape = 'u8[4096]{0}', space=vmem, size = 0x1000, scoped, tag = 'input window, operand 1, single buffered']
    #allocation5 [shape = 's32[1]{0}', space=sflag, size = 0x4, scoped, tag = 'scoped memory for tpu_custom_call.1']
    #allocation6 [shape = 'u8[32768]{0}', space=vmem, size = 0x8000, scoped, tag = 'input window, operand 3, single buffered']
    #allocation7 [shape = 'u8[32768]{0}', space=vmem, size = 0x8000, scoped, tag = 'input window, operand 5, single buffered']
    #allocation8 [shape = 's32[1]{0}', space=sflag, size = 0x4, scoped, tag = 'scoped memory for tpu_custom_call.1']
    %12 = vsyncpa [#allocation3], 0
    %13 = vsyncpa [#allocation5], 0
    %14 = vsyncpa [#allocation8], 0
    // Predicated region
    $region2: #{tpu_custom_call.1} parent=1 // pred_check
      _
    $region3: #{tpu_custom_call.1} parent=1 // pred_check_branch
      %16 = sbr.rel (0) target = $region5
    $region4: #{tpu_custom_call.1} parent=1 // pred_region
      %s18 = ssub.s32 128, 128
      %19 = vsyncadd [#allocation3], %s18
      %s21 = sshll.u32 [#allocation2], 4
      %s22 = int_to_ptr.vmem [resolvable:$true] %s21
      %24 = dma.hbm_to_vmem [thread:$0]  %s0, 128, %s22, [#allocation3]
    $region5: #{tpu_custom_call.1} parent=1 // pred_fallthru
      _
    // Predicated region
    $region6: #{tpu_custom_call.1} parent=1 // pred_check
      _
    $region7: #{tpu_custom_call.1} parent=1 // pred_check_branch
      %26 = sbr.rel (0) target = $region9
    $region8: #{tpu_custom_call.1} parent=1 // pred_region
      %s28 = ssub.s32 128, 128
      %29 = vsyncadd [#allocation5], %s28
      %s30 = sshll.u32 [#allocation4], 4
      %s31 = int_to_ptr.vmem [resolvable:$true] %s30
      %36 = dma.hbm_to_vmem [thread:$0]  %s1, 128, %s31, [#allocation5], 64, 64, 4
    $region9: #{tpu_custom_call.1} parent=1 // pred_fallthru
      _
    // Predicated region
    $region10: #{tpu_custom_call.1} parent=1 // pred_check
      _
    $region11: #{tpu_custom_call.1} parent=1 // pred_check_branch
      %38 = sbr.rel (0) target = $region13
    $region12: #{tpu_custom_call.1} parent=1 // pred_region
      _
    $region13: #{tpu_custom_call.1} parent=1 // pred_fallthru
      _
    // Predicated region
    $region14: #{tpu_custom_call.1} parent=1 // pred_check
      _
    $region15: #{tpu_custom_call.1} parent=1 // pred_check_branch
      %40 = sbr.rel (0) target = $region17
    $region16: #{tpu_custom_call.1} parent=1 // pred_region
      %s42 = ssub.s32 1024, 1024
      %43 = vsyncadd [#allocation5], %s42
      %s44 = sshll.u32 [#allocation6], 4
      %s45 = int_to_ptr.vmem [resolvable:$true] %s44
      %50 = dma.hbm_to_vmem [thread:$0]  %s3, 1024, %s45, [#allocation5], 64, 64, 4
    $region17: #{tpu_custom_call.1} parent=1 // pred_fallthru
      _
    // Predicated region
    $region18: #{tpu_custom_call.1} parent=1 // pred_check
      _
    $region19: #{tpu_custom_call.1} parent=1 // pred_check_branch
      %52 = sbr.rel (0) target = $region21
    $region20: #{tpu_custom_call.1} parent=1 // pred_region
      _
    $region21: #{tpu_custom_call.1} parent=1 // pred_fallthru
      _
    // Predicated region
    $region22: #{tpu_custom_call.1} parent=1 // pred_check
      _
    $region23: #{tpu_custom_call.1} parent=1 // pred_check_branch
      %54 = sbr.rel (0) target = $region25
    $region24: #{tpu_custom_call.1} parent=1 // pred_region
      %s56 = ssub.s32 1024, 1024
      %57 = vsyncadd [#allocation8], %s56
      %s58 = sshll.u32 [#allocation7], 4
      %s59 = int_to_ptr.vmem [resolvable:$true] %s58
      %64 = dma.hbm_to_vmem [thread:$0]  %s5, 1024, %s59, [#allocation8], 64, 64, 4
    $region25: #{tpu_custom_call.1} parent=1 // pred_fallthru
      _
    // Predicated region
    $region26: #{tpu_custom_call.1} parent=1 // pred_check
      _
    $region27: #{tpu_custom_call.1} parent=1 // pred_check_branch
      %66 = sbr.rel (0) target = $region29
    $region28: #{tpu_custom_call.1} parent=1 // pred_region
      _
    $region29: #{tpu_custom_call.1} parent=1 // pred_fallthru
      _
    // Predicated region
    $region30: #{tpu_custom_call.1} parent=1 // pred_check
      _
    $region31: #{tpu_custom_call.1} parent=1 // pred_check_branch
      %68 = sbr.rel (0) target = $region33
    $region32: #{tpu_custom_call.1} parent=1 // pred_region
      %69 = dma.done [#allocation3], 128
    $region33: #{tpu_custom_call.1} parent=1 // pred_fallthru
      _
    // Predicated region
    $region34: #{tpu_custom_call.1} parent=1 // pred_check
      _
    $region35: #{tpu_custom_call.1} parent=1 // pred_check_branch
      %71 = sbr.rel (0) target = $region37
    $region36: #{tpu_custom_call.1} parent=1 // pred_region
      %72 = dma.done [#allocation5], 128
    $region37: #{tpu_custom_call.1} parent=1 // pred_fallthru
      _
    // Predicated region
    $region38: #{tpu_custom_call.1} parent=1 // pred_check
      _
    $region39: #{tpu_custom_call.1} parent=1 // pred_check_branch
      %74 = sbr.rel (0) target = $region41
    $region40: #{tpu_custom_call.1} parent=1 // pred_region
      %75 = dma.done [#allocation5], 1024
    $region41: #{tpu_custom_call.1} parent=1 // pred_fallthru
      _
    // Predicated region
    $region42: #{tpu_custom_call.1} parent=1 // pred_check
      _
    $region43: #{tpu_custom_call.1} parent=1 // pred_check_branch
      %77 = sbr.rel (0) target = $region45
    $region44: #{tpu_custom_call.1} parent=1 // pred_region
      %78 = dma.done [#allocation8], 1024
    $region45: #{tpu_custom_call.1} parent=1 // pred_fallthru
      _
    %v80 = vld [vmem:[#allocation2] sm:$0xff]
    %v81 = vpack.c.bf16 %v80, %v80
    %v82 = vld [vmem:[#allocation4] sm:$0xf]
    %v83 = vld [vmem:[#allocation4 + $0x4] sm:$0xf]
    %v84 = vld [vmem:[%s2] sm:$0x1]
    %v86 = vlaneseq
    %v87 = vshrl.u32 %v86, 7
    %v88 = vsub.s32 0, %v87
    %v89 = vrot.slane %v84, %v88
    %v93 = vunpack.c.l.b16 %v82
    %v94 = vunpack.c.l.b16 %v83
    %v95 = vpack.c.b16 %v94, %v93
    %vm97 = vcmask 130048
    %v99 = vsel %vm97, %v81, 0
    %101 = vmatprep.subr.bf16.mxu0 0
    %102 = vmatpush1.bf16.msra.mxu0 0
    %103 = vmatprep.subr.bf16.mxu0 0
    %104 = vmatpush1.bf16.msra.mxu0 0
    %105 = vmatprep.subr.bf16.mxu0 0
    %106 = vmatpush1.bf16.msra.mxu0 0
    %107 = vmatprep.subr.bf16.mxu0 0
    %108 = vmatpush1.bf16.msra.mxu0 0
    %109 = vmatprep.subr.bf16.mxu0 0
    %110 = vmatpush1.bf16.msra.mxu0 0
    %111 = vmatprep.subr.bf16.mxu0 0
    %112 = vmatpush1.bf16.msra.mxu0 0
    %113 = vmatprep.subr.bf16.mxu0 0
    %114 = vmatpush1.bf16.msra.mxu0 0
    %115 = vmatprep.subr.bf16.mxu0 0
    %116 = vmatpush1.bf16.msra.mxu0 %v95
    %117 = vmatprep.subr.bf16.mxu0 0
    %118 = vmatpush2.bf16.msra.mxu0 0
    %119 = vmatprep.subr.bf16.mxu0 0
    %120 = vmatpush2.bf16.msra.mxu0 0
    %121 = vmatprep.subr.bf16.mxu0 0
    %122 = vmatpush2.bf16.msra.mxu0 0
    %123 = vmatprep.subr.bf16.mxu0 0
    %124 = vmatpush2.bf16.msra.mxu0 0
    %125 = vmatprep.subr.bf16.mxu0 0
    %126 = vmatpush2.bf16.msra.mxu0 0
    %127 = vmatprep.subr.bf16.mxu0 0
    %128 = vmatpush2.bf16.msra.mxu0 0
    %129 = vmatprep.subr.bf16.mxu0 0
    %130 = vmatpush2.bf16.msra.mxu0 0
    %131 = vmatprep.subr.bf16.mxu0 0
    %132 = vmatpush2.bf16.msra.mxu0 0
    %133 = vmatprep.mubr.bf16.mxu0 0
    %134 = vmatmul.mubr.bf16.gmra.mxu0 %v99
    %v135 = vpop.f32.mrf.mxu0
    %v136 = vadd.f32 %v89, %v135
    %v137 = vpop.f32.mrf.mxu0
    %v138 = vpop.f32.mrf.mxu0
    %v139 = vpop.f32.mrf.mxu0
    %140 = vdwg.mxu0
    %v141 = vtanh.pop %v136
    %v142 = vpack.c.bf16 %v141, %v141
    %v143 = vld [vmem:[#allocation6] sm:$0xf]
    %v144 = vld [vmem:[#allocation6 + $0x4] sm:$0xf]
    %v145 = vld [vmem:[#allocation6 + $0x8] sm:$0xf]
    %v146 = vld [vmem:[#allocation6 + $0xc] sm:$0xf]
    %v147 = vld [vmem:[#allocation6 + $0x10] sm:$0xf]
    %v148 = vld [vmem:[#allocation6 + $0x14] sm:$0xf]
    %v149 = vld [vmem:[#allocation6 + $0x18] sm:$0xf]
    %v150 = vld [vmem:[#allocation6 + $0x1c] sm:$0xf]
    %v151 = vld [vmem:[#allocation6 + $0x20] sm:$0xf]
    %v152 = vld [vmem:[#allocation6 + $0x24] sm:$0xf]
    %v153 = vld [vmem:[#allocation6 + $0x28] sm:$0xf]
    %v154 = vld [vmem:[#allocation6 + $0x2c] sm:$0xf]
    %v155 = vld [vmem:[#allocation6 + $0x30] sm:$0xf]
    %v156 = vld [vmem:[#allocation6 + $0x34] sm:$0xf]
    %v157 = vld [vmem:[#allocation6 + $0x38] sm:$0xf]
    %v158 = vld [vmem:[#allocation6 + $0x3c] sm:$0xf]
    %v159 = vld [vmem:[%s4] sm:$0x1]
    %v161 = vlaneseq
    %v162 = vshrl.u32 %v161, 7
    %v163 = vsub.s32 0, %v162
    %v164 = vrot.slane %v159, %v163
    %v182 = vunpack.c.l.b16 %v143
    %v183 = vunpack.c.l.b16 %v144
    %v184 = vunpack.c.l.b16 %v145
    %v185 = vunpack.c.l.b16 %v146
    %v186 = vunpack.c.l.b16 %v147
    %v187 = vunpack.c.l.b16 %v148
    %v188 = vunpack.c.l.b16 %v149
    %v189 = vunpack.c.l.b16 %v150
    %v190 = vunpack.c.l.b16 %v151
    %v191 = vunpack.c.l.b16 %v152
    %v192 = vunpack.c.l.b16 %v153
    %v193 = vunpack.c.l.b16 %v154
    %v194 = vunpack.c.l.b16 %v155
    %v195 = vunpack.c.l.b16 %v156
    %v196 = vunpack.c.l.b16 %v157
    %v197 = vunpack.c.l.b16 %v158
    %v198 = vpack.c.b16 %v183, %v182
    %v199 = vpack.c.b16 %v185, %v184
    %v200 = vpack.c.b16 %v187, %v186
    %v201 = vpack.c.b16 %v189, %v188
    %v202 = vpack.c.b16 %v191, %v190
    %v203 = vpack.c.b16 %v193, %v192
    %v204 = vpack.c.b16 %v195, %v194
    %v205 = vpack.c.b16 %v197, %v196
    %214 = vmatprep.subr.bf16.mxu0 0
    %215 = vmatpush1.bf16.msra.mxu0 %v205
    %216 = vmatprep.subr.bf16.mxu0 0
    %217 = vmatpush1.bf16.msra.mxu0 %v204
    %218 = vmatprep.subr.bf16.mxu0 0
    %219 = vmatpush1.bf16.msra.mxu0 %v203
    %220 = vmatprep.subr.bf16.mxu0 0
    %221 = vmatpush1.bf16.msra.mxu0 %v202
    %222 = vmatprep.subr.bf16.mxu0 0
    %223 = vmatpush1.bf16.msra.mxu0 %v201
    %224 = vmatprep.subr.bf16.mxu0 0
    %225 = vmatpush1.bf16.msra.mxu0 %v200
    %226 = vmatprep.subr.bf16.mxu0 0
    %227 = vmatpush1.bf16.msra.mxu0 %v199
    %228 = vmatprep.subr.bf16.mxu0 0
    %229 = vmatpush1.bf16.msra.mxu0 %v198
    %230 = vmatprep.subr.bf16.mxu0 0
    %231 = vmatpush2.bf16.msra.mxu0 0
    %232 = vmatprep.subr.bf16.mxu0 0
    %233 = vmatpush2.bf16.msra.mxu0 0
    %234 = vmatprep.subr.bf16.mxu0 0
    %235 = vmatpush2.bf16.msra.mxu0 0
    %236 = vmatprep.subr.bf16.mxu0 0
    %237 = vmatpush2.bf16.msra.mxu0 0
    %238 = vmatprep.subr.bf16.mxu0 0
    %239 = vmatpush2.bf16.msra.mxu0 0
    %240 = vmatprep.subr.bf16.mxu0 0
    %241 = vmatpush2.bf16.msra.mxu0 0
    %242 = vmatprep.subr.bf16.mxu0 0
    %243 = vmatpush2.bf16.msra.mxu0 0
    %244 = vmatprep.subr.bf16.mxu0 0
    %245 = vmatpush2.bf16.msra.mxu0 0
    %246 = vmatprep.mubr.bf16.mxu0 0
    %247 = vmatmul.mubr.bf16.gmra.mxu0 %v142
    %v248 = vpop.f32.mrf.mxu0
    %v249 = vadd.f32 %v164, %v248
    %v250 = vpop.f32.mrf.mxu0
    %v251 = vpop.f32.mrf.mxu0
    %v252 = vpop.f32.mrf.mxu0
    %253 = vdwg.mxu0
    %v254 = vtanh.pop %v249
    %v255 = vpack.c.bf16 %v254, %v254
    %v256 = vld [vmem:[#allocation7] sm:$0xf]
    %v257 = vld [vmem:[#allocation7 + $0x4] sm:$0xf]
    %v258 = vld [vmem:[#allocation7 + $0x8] sm:$0xf]
    %v259 = vld [vmem:[#allocation7 + $0xc] sm:$0xf]
    %v260 = vld [vmem:[#allocation7 + $0x10] sm:$0xf]
    %v261 = vld [vmem:[#allocation7 + $0x14] sm:$0xf]
    %v262 = vld [vmem:[#allocation7 + $0x18] sm:$0xf]
    %v263 = vld [vmem:[#allocation7 + $0x1c] sm:$0xf]
    %v264 = vld [vmem:[#allocation7 + $0x20] sm:$0xf]
    %v265 = vld [vmem:[#allocation7 + $0x24] sm:$0xf]
    %v266 = vld [vmem:[#allocation7 + $0x28] sm:$0xf]
    %v267 = vld [vmem:[#allocation7 + $0x2c] sm:$0xf]
    %v268 = vld [vmem:[#allocation7 + $0x30] sm:$0xf]
    %v269 = vld [vmem:[#allocation7 + $0x34] sm:$0xf]
    %v270 = vld [vmem:[#allocation7 + $0x38] sm:$0xf]
    %v271 = vld [vmem:[#allocation7 + $0x3c] sm:$0xf]
    %v272 = vld [vmem:[%s6] sm:$0x1]
    %v274 = vlaneseq
    %v275 = vshrl.u32 %v274, 7
    %v276 = vsub.s32 0, %v275
    %v277 = vrot.slane %v272, %v276
    %v295 = vunpack.c.l.b16 %v256
    %v296 = vunpack.c.l.b16 %v257
    %v297 = vunpack.c.l.b16 %v258
    %v298 = vunpack.c.l.b16 %v259
    %v299 = vunpack.c.l.b16 %v260
    %v300 = vunpack.c.l.b16 %v261
    %v301 = vunpack.c.l.b16 %v262
    %v302 = vunpack.c.l.b16 %v263
    %v303 = vunpack.c.l.b16 %v264
    %v304 = vunpack.c.l.b16 %v265
    %v305 = vunpack.c.l.b16 %v266
    %v306 = vunpack.c.l.b16 %v267
    %v307 = vunpack.c.l.b16 %v268
    %v308 = vunpack.c.l.b16 %v269
    %v309 = vunpack.c.l.b16 %v270
    %v310 = vunpack.c.l.b16 %v271
    %v311 = vpack.c.b16 %v296, %v295
    %v312 = vpack.c.b16 %v298, %v297
    %v313 = vpack.c.b16 %v300, %v299
    %v314 = vpack.c.b16 %v302, %v301
    %v315 = vpack.c.b16 %v304, %v303
    %v316 = vpack.c.b16 %v306, %v305
    %v317 = vpack.c.b16 %v308, %v307
    %v318 = vpack.c.b16 %v310, %v309
    %327 = vmatprep.subr.bf16.mxu0 0
    %328 = vmatpush1.bf16.msra.mxu0 %v318
    %329 = vmatprep.subr.bf16.mxu0 0
    %330 = vmatpush1.bf16.msra.mxu0 %v317
    %331 = vmatprep.subr.bf16.mxu0 0
    %332 = vmatpush1.bf16.msra.mxu0 %v316
    %333 = vmatprep.subr.bf16.mxu0 0
    %334 = vmatpush1.bf16.msra.mxu0 %v315
    %335 = vmatprep.subr.bf16.mxu0 0
    %336 = vmatpush1.bf16.msra.mxu0 %v314
    %337 = vmatprep.subr.bf16.mxu0 0
    %338 = vmatpush1.bf16.msra.mxu0 %v313
    %339 = vmatprep.subr.bf16.mxu0 0
    %340 = vmatpush1.bf16.msra.mxu0 %v312
    %341 = vmatprep.subr.bf16.mxu0 0
    %342 = vmatpush1.bf16.msra.mxu0 %v311
    %343 = vmatprep.subr.bf16.mxu0 0
    %344 = vmatpush2.bf16.msra.mxu0 0
    %345 = vmatprep.subr.bf16.mxu0 0
    %346 = vmatpush2.bf16.msra.mxu0 0
    %347 = vmatprep.subr.bf16.mxu0 0
    %348 = vmatpush2.bf16.msra.mxu0 0
    %349 = vmatprep.subr.bf16.mxu0 0
    %350 = vmatpush2.bf16.msra.mxu0 0
    %351 = vmatprep.subr.bf16.mxu0 0
    %352 = vmatpush2.bf16.msra.mxu0 0
    %353 = vmatprep.subr.bf16.mxu0 0
    %354 = vmatpush2.bf16.msra.mxu0 0
    %355 = vmatprep.subr.bf16.mxu0 0
    %356 = vmatpush2.bf16.msra.mxu0 0
    %357 = vmatprep.subr.bf16.mxu0 0
    %358 = vmatpush2.bf16.msra.mxu0 0
    %359 = vmatprep.mubr.bf16.mxu0 0
    %360 = vmatmul.mubr.bf16.gmra.mxu0 %v255
    %v361 = vpop.f32.mrf.mxu0
    %v362 = vadd.f32 %v277, %v361
    %v363 = vpop.f32.mrf.mxu0
    %v364 = vpop.f32.mrf.mxu0
    %v365 = vpop.f32.mrf.mxu0
    %366 = vdwg.mxu0
    %vm367 = vcmask 31744
    %368 = vst.msk [vmem:[%s7] sm:$0xff] %vm367, %v362
    // Predicated region
    $region46: #{tpu_custom_call.1} parent=1 // pred_check
      _
    $region47: #{tpu_custom_call.1} parent=1 // pred_check_branch
      %370 = sbr.rel (0) target = $region49
    $region48: #{tpu_custom_call.1} parent=1 // pred_region
      _
    $region49: #{tpu_custom_call.1} parent=1 // pred_fallthru
      _
    // Predicated region
    $region50: #{tpu_custom_call.1} parent=1 // pred_check
      _
    $region51: #{tpu_custom_call.1} parent=1 // pred_check_branch
      %372 = sbr.rel (0) target = $region53
    $region52: #{tpu_custom_call.1} parent=1 // pred_region
      _
    $region53: #{tpu_custom_call.1} parent=1 // pred_fallthru
      _
    %373 = vsyncpa [#allocation3], 1
    %374 = vsyncpa [#allocation5], 1
    %375 = vsyncpa [#allocation8], 1

</llo_original>
